<compile_context>
chip_gen: v7x
topology: tpu7x:2x2x1
jax: 0.10.0
libtpu: 0.0.40
codegen_flags: <defaults>
</compile_context>

<pallas_src>
import jax
import jax.numpy as jnp
from jax.experimental import pallas as pl
from jax.experimental.pallas import tpu as pltpu


def _tpu_generation():
    """Best-effort TPU generation from the device kind ('TPU v6e' -> 6).

    Returns None when undetermined; callers then fall back to the conservative
    (minimal-grid, 16 MiB-VMEM-guard) configuration, which is always correct.
    """
    try:
        kind = jax.devices()[0].device_kind.lower()
    except Exception:
        return None
    for gen in (7, 6, 5, 4, 3, 2):
        if f"v{gen}" in kind or f"tpu{gen}" in kind or f"tpu {gen}" in kind:
            return gen
    return None


def _select_tiles(B, H, gen):
    """(tb, tn) output tile sizes.

    tb: batch rows per block (full B when small, else 256, v5e-guarded).
    tn: output-H columns per block.  On v7x the H axis is split into >= 2 tiles
        so both TensorCores get work; v5e/v6e keep the minimal grid.
    """
    tb = B if B <= 256 else 256

    if gen is not None and gen >= 7 and H >= 512 and H % 128 == 0:
        # Split N across v7x's two TensorCores; keep tn >= 256 so output
        # stores stay lane-dense and the 2x256 MXU N-dim stays full.
        tn = max(256, ((H // 2 + 127) // 128) * 128)
    elif H <= 1024:
        tn = H
    else:
        tn = 512

    # v5e (16 MiB default scoped VMEM) guard for very large H: shrink the
    # batch tile so double-buffered x / w / out blocks keep fitting.
    if (gen is None or gen <= 5) and H > 2048 and tb > 128:
        tb = 128

    return tb, tn


def _pooler_kernel(x_ref, w_ref, b_ref, o_ref):
    # x_ref: (tb, H_in) bf16      w_ref: (H_in, tn) bf16 (pre-transposed)
    # b_ref: (1, tn)    f32       o_ref: (tb, tn)
    y = jnp.dot(x_ref[...], w_ref[...], preferred_element_type=jnp.float32)
    o_ref[...] = jnp.tanh(y + b_ref[...]).astype(o_ref.dtype)


def prepare_pooler_weight(weight):
    """One-time parameter prep: PyTorch (out, in) layout -> (in, out), bf16."""
    return jnp.asarray(weight).T.astype(jnp.bfloat16)


def bert_pooler(hidden_states, weight_t, bias):
    """hidden_states: (B, S, H) float32
    weight_t: (H_in, H_out) bfloat16 -- prepared ONCE via prepare_pooler_weight
              (the bf16 / pre-transposed fast path is mandatory).
    bias:     (H,)
    returns   (B, H) with hidden_states.dtype
    """
    B, S, H = hidden_states.shape
    if weight_t.dtype != jnp.bfloat16 or tuple(weight_t.shape) != (H, H):
        raise ValueError(
            "bert_pooler expects a (H_in, H_out) bfloat16 weight prepared by "
            f"prepare_pooler_weight(); got shape={weight_t.shape} "
            f"dtype={weight_t.dtype}. Re-casting / re-transposing per call "
            "would triple the weight-path HBM traffic.")

    # First-token slice + bf16 cast: one tiny fused op (keep this wrapper
    # inside the caller's jit so it fuses with the upstream producer).
    first_token = hidden_states[:, 0, :].astype(jnp.bfloat16)     # (B, H) bf16
    b2d = bias.reshape(1, H).astype(jnp.float32)                  # (1, H) f32

    gen = _tpu_generation()
    tb, tn = _select_tiles(B, H, gen)

    grid = (pl.cdiv(H, tn), pl.cdiv(B, tb))  # N outer, B inner (weight-stationary)

    out_dtype = hidden_states.dtype
    cost = pl.CostEstimate(
        flops=2 * B * H * H,
        transcendentals=B * H,
        bytes_accessed=(H * H * 2                      # weight, bf16, read once
                        + grid[0] * B * H * 2          # x bf16, re-read per N-tile
                        + H * 4                        # bias
                        + B * H * jnp.dtype(out_dtype).itemsize),
    )

    return pl.pallas_call(
        _pooler_kernel,
        out_shape=jax.ShapeDtypeStruct((B, H), out_dtype),
        grid_spec=pltpu.PrefetchScalarGridSpec(
            num_scalar_prefetch=0,
            grid=grid,
            in_specs=[
                pl.BlockSpec((tb, H), lambda j, i: (i, 0)),   # x rows (bf16)
                pl.BlockSpec((H, tn), lambda j, i: (0, j)),   # weight (in, out)
                pl.BlockSpec((1, tn), lambda j, i: (0, j)),   # bias slab
            ],
            out_specs=pl.BlockSpec((tb, tn), lambda j, i: (i, j)),
        ),
        compiler_params=pltpu.CompilerParams(
            # Independent output tiles on both axes -> shard across v7x's 2 TCs.
            dimension_semantics=("parallel", "parallel"),
        ),
        cost_estimate=cost,
    )(first_token, weight_t, b2d)


if __name__ == "__main__":
    B, S, H = 2, 8, 32  # small shapes consistent with the module

    key = jax.random.PRNGKey(0)
    k_x, k_w, k_b = jax.random.split(key, 3)

    hidden_states = jax.random.normal(k_x, (B, S, H), dtype=jnp.float32)
    # nn.Linear(H, H): weight (out_features, in_features), bias (H,)
    weight_f32 = jax.random.normal(k_w, (H, H), dtype=jnp.float32) * 0.02
    bias = jax.random.normal(k_b, (H,), dtype=jnp.float32) * 0.02

    # Parameter-load-time prep: transpose to (in, out) + cast to bf16, once.
    weight_t = prepare_pooler_weight(weight_f32)

    pooler = jax.jit(bert_pooler)
    out = jax.block_until_ready(pooler(hidden_states, weight_t, bias))

    # Numerics-matched reference (bf16 operands, f32 accumulate, f32 bias/tanh).
    x0 = hidden_states[:, 0, :]
    ref_matched = jnp.tanh(
        jnp.dot(x0.astype(jnp.bfloat16), weight_t,
                preferred_element_type=jnp.float32) + bias)
    # Full-f32 semantic reference (same math as the PyTorch forward).
    ref_f32 = jnp.tanh(x0 @ weight_f32.T + bias)

    assert out.shape == (B, H) and out.dtype == hidden_states.dtype
    assert jnp.allclose(out, ref_matched, atol=1e-5, rtol=1e-5)
    assert jnp.allclose(out, ref_f32, atol=2e-2, rtol=2e-2)

    print("KERNEL_OK")
</pallas_src>

<mosaic_0001>
module attributes {stable_mosaic.version = 11 : i64} {
  func.func @_pooler_kernel(%arg0: i32, %arg1: i32, %arg2: memref<2x32xbf16, #tpu.memory_space<vmem>>, %arg3: memref<32x32xbf16, #tpu.memory_space<vmem>>, %arg4: memref<1x32xf32, #tpu.memory_space<vmem>>, %arg5: memref<2x32xf32, #tpu.memory_space<vmem>>) attributes {dimension_semantics = [#tpu.dimension_semantics<parallel>, #tpu.dimension_semantics<parallel>], iteration_bounds = array<i64: 1, 1>, scalar_prefetch = 0 : i64, scratch_operands = 0 : i64, tpu.core_type = #tpu.core_type<tc>, window_params = [{transform_indices = @transform_0, window_bounds = array<i64: 2, 32>}, {transform_indices = @transform_1, window_bounds = array<i64: 32, 32>}, {transform_indices = @transform_2, window_bounds = array<i64: 1, 32>}, {transform_indices = @transform_3, window_bounds = array<i64: 2, 32>}]} {
    %c0 = arith.constant 0 : index
    %c0_0 = arith.constant 0 : index
    %0 = vector.load %arg2[%c0, %c0_0] : memref<2x32xbf16, #tpu.memory_space<vmem>>, vector<2x32xbf16>
    %c0_1 = arith.constant 0 : index
    %c0_2 = arith.constant 0 : index
    %1 = vector.load %arg3[%c0_1, %c0_2] : memref<32x32xbf16, #tpu.memory_space<vmem>>, vector<32x32xbf16>
    %cst = arith.constant dense<0.000000e+00> : vector<2x32xf32>
    %2 = tpu.matmul %0, %1, %cst {dimension_numbers = #tpu.dot_dimension_numbers<[1], [0], [0], [1], [0, 0, 1, 1], [], []>} : vector<2x32xbf16>, vector<32x32xbf16>, vector<2x32xf32> -> vector<2x32xf32>
    %c0_3 = arith.constant 0 : index
    %c0_4 = arith.constant 0 : index
    %3 = vector.load %arg4[%c0_3, %c0_4] : memref<1x32xf32, #tpu.memory_space<vmem>>, vector<1x32xf32>
    %4 = vector.broadcast %3 : vector<1x32xf32> to vector<2x32xf32>
    %5 = arith.addf %2, %4 : vector<2x32xf32>
    %6 = math.tanh %5 : vector<2x32xf32>
    %c0_5 = arith.constant 0 : index
    %c0_6 = arith.constant 0 : index
    %7 = vector.load %arg5[%c0_5, %c0_6] : memref<2x32xf32, #tpu.memory_space<vmem>>, vector<2x32xf32>
    tpu.vector_store %arg5[%c0_5, %c0_6], %6 {strides = array<i32>} : memref<2x32xf32, #tpu.memory_space<vmem>>, vector<2x32xf32>,
    return
  }
  func.func @transform_0(%arg0: i32, %arg1: i32) -> (i32, i32) {
    %c0_i32 = arith.constant 0 : i32
    %c0_i32_0 = arith.constant 0 : i32
    return %arg1, %c0_i32 : i32, i32
  }
  func.func @transform_1(%arg0: i32, %arg1: i32) -> (i32, i32) {
    %c0_i32 = arith.constant 0 : i32
    %c0_i32_0 = arith.constant 0 : i32
    return %c0_i32, %arg0 : i32, i32
  }
  func.func @transform_2(%arg0: i32, %arg1: i32) -> (i32, i32) {
    %c0_i32 = arith.constant 0 : i32
    %c0_i32_0 = arith.constant 0 : i32
    return %c0_i32, %arg0 : i32, i32
  }
  func.func @transform_3(%arg0: i32, %arg1: i32) -> (i32, i32) {
    %c0_i32 = arith.constant 0 : i32
    return %arg1, %arg0 : i32, i32
  }
}

</mosaic_0001>

<llo_original>
// kernel: bert_pooler.1
$region0: #{bert_pooler.1}
  #allocation0 [shape = 'u32[]', space=smem, size = 0x4, offset = 0x4, fixed_abs, tag = 'smem constant byte address 0x4 - core index']
  #allocation1 [shape = 'u32[144,128]{1,0:T(1,128)}', space=vmem, size = 0x12000, scoped, tag = 'internal scratch']
  %s0 = inlined_call_operand.vmem [shape: bf16[2,32], index: 0, kind: input, shape index: {}]
  %s1 = inlined_call_operand.hbm [shape: bf16[32,32], index: 1, kind: input, shape index: {}]
  %s2 = inlined_call_operand.vmem [shape: f32[1,32], index: 2, kind: input, shape index: {}]
  %s3 = inlined_call_operand.hbm [shape: f32[2,32], index: 3, kind: output, shape index: {}]
  %s4 = sld [smem:[#allocation0]]
  $region26: #{bert_pooler.1} parent=0
    _
  %s6 = ssub.s32 1, %s4
  %s7 = scalar_select 0, %s6, %s4
  $region1: #{bert_pooler.1} parent=0
    #allocation2 [shape = 'u8[8192]{0}', space=vmem, size = 0x2000, scoped, tag = 'input window, operand 1, single buffered']
    #allocation3 [shape = 's32[1]{0}', space=sflag, size = 0x4, scoped, tag = 'scoped memory for bert_pooler.1']
    #allocation4 [shape = 's32[1]{0}', space=sflag, size = 0x4, scoped, tag = 'scoped memory for bert_pooler.1']
    #allocation5 [shape = 'u8[1024]{0}', space=vmem, size = 0x400, scoped, tag = 'output window, operand 0, single buffered']
    %8 = vsyncpa [#allocation3], 0
    %9 = vsyncpa [#allocation4], 0
    // Predicated region
    $region2: #{bert_pooler.1} parent=1 // pred_check
      _
    $region3: #{bert_pooler.1} parent=1 // pred_check_branch
      %11 = sbr.rel (0) target = $region5
    $region4: #{bert_pooler.1} parent=1 // pred_region
      _
    $region5: #{bert_pooler.1} parent=1 // pred_fallthru
      _
    // Predicated region
    $region6: #{bert_pooler.1} parent=1 // pred_check
      _
    $region7: #{bert_pooler.1} parent=1 // pred_check_branch
      %13 = sbr.rel (0) target = $region9
    $region8: #{bert_pooler.1} parent=1 // pred_region
      %s15 = ssub.s32 256, 256
      %16 = vsyncadd [#allocation3], %s15
      %s17 = sshll.u32 [#allocation2], 4
      %s18 = int_to_ptr.vmem [resolvable:$true] %s17
      %23 = dma.hbm_to_vmem [thread:$0]  %s1, 256, %s18, [#allocation3], 64, 64, 4
    $region9: #{bert_pooler.1} parent=1 // pred_fallthru
      _
    // Predicated region
    $region10: #{bert_pooler.1} parent=1 // pred_check
      _
    $region11: #{bert_pooler.1} parent=1 // pred_check_branch
      %25 = sbr.rel (0) target = $region13
    $region12: #{bert_pooler.1} parent=1 // pred_region
      _
    $region13: #{bert_pooler.1} parent=1 // pred_fallthru
      _
    // Predicated region
    $region14: #{bert_pooler.1} parent=1 // pred_check
      _
    $region15: #{bert_pooler.1} parent=1 // pred_check_branch
      %27 = sbr.rel (0) target = $region17
    $region16: #{bert_pooler.1} parent=1 // pred_region
      %28 = dma.done [#allocation3], 256
    $region17: #{bert_pooler.1} parent=1 // pred_fallthru
      _
    %v30 = vld [vmem:[%s0] sm:$0x1]
    %v31 = vld [vmem:[#allocation2] sm:$0xf]
    %v32 = vld [vmem:[#allocation2 + $0x4] sm:$0xf]
    %v33 = vld [vmem:[#allocation2 + $0x8] sm:$0xf]
    %v34 = vld [vmem:[#allocation2 + $0xc] sm:$0xf]
    %v35 = vld [vmem:[%s2] sm:$0x1]
    %v37 = vlaneseq
    %v38 = vshrl.u32 %v37, 7
    %v39 = vsub.s32 0, %v38
    %v40 = vrot.slane %v35, %v39
    %v46 = vunpack.c.l.b16 %v31
    %v47 = vunpack.c.l.b16 %v32
    %v48 = vunpack.c.l.b16 %v33
    %v49 = vunpack.c.l.b16 %v34
    %v50 = vpack.c.b16 %v47, %v46
    %v51 = vpack.c.b16 %v49, %v48
    %vm54 = vcmask 261120
    %v56 = vsel %vm54, %v30, 0
    %58 = vmatprep.subr.bf16.mxu0 0
    %59 = vmatpush1.bf16.msra.mxu0 %v50
    %60 = vmatprep.subr.bf16.mxu0 0
    %61 = vmatpush1.bf16.msra.mxu0 %v51
    %62 = vmatprep.subr.bf16.mxu0 0
    %63 = vmatpush1.bf16.msra.mxu0 0
    %64 = vmatprep.subr.bf16.mxu0 0
    %65 = vmatpush1.bf16.msra.mxu0 0
    %66 = vmatprep.subr.bf16.mxu0 0
    %67 = vmatpush1.bf16.msra.mxu0 0
    %68 = vmatprep.subr.bf16.mxu0 0
    %69 = vmatpush1.bf16.msra.mxu0 0
    %70 = vmatprep.subr.bf16.mxu0 0
    %71 = vmatpush1.bf16.msra.mxu0 0
    %72 = vmatprep.subr.bf16.mxu0 0
    %73 = vmatpush1.bf16.msra.mxu0 0
    %74 = vmatprep.subr.bf16.mxu0 0
    %75 = vmatpush1.bf16.msra.mxu0 0
    %76 = vmatprep.subr.bf16.mxu0 0
    %77 = vmatpush1.bf16.msra.mxu0 0
    %78 = vmatprep.subr.bf16.mxu0 0
    %79 = vmatpush1.bf16.msra.mxu0 0
    %80 = vmatprep.subr.bf16.mxu0 0
    %81 = vmatpush1.bf16.msra.mxu0 0
    %82 = vmatprep.subr.bf16.mxu0 0
    %83 = vmatpush1.bf16.msra.mxu0 0
    %84 = vmatprep.subr.bf16.mxu0 0
    %85 = vmatpush1.bf16.msra.mxu0 0
    %86 = vmatprep.subr.bf16.mxu0 0
    %87 = vmatpush1.bf16.msra.mxu0 0
    %88 = vmatprep.subr.bf16.mxu0 0
    %89 = vmatpush1.bf16.msra.mxu0 0
    %90 = vmatprep.mubr.bf16.mxu0 0
    %91 = vmatmul.mubr.bf16.gmra.mrb[0].mxu0 %v56
    %v92 = vpop.f32.mrb[0].mxu0
    %v93 = vadd.f32 %v40, %v92
    %v94 = vpop.f32.mrb[0].mxu0
    %v95 = vpop.f32.mrb[0].mxu0
    %v96 = vpop.f32.mrb[0].mxu0
    %97 = vdwg.mxu0
    %v98 = vtanh.pop %v93
    %vm99 = vcmask 254976
    %100 = vst.msk [vmem:[#allocation5] sm:$0x3] %vm99, %v98
    // Predicated region
    $region18: #{bert_pooler.1} parent=1 // pred_check
      _
    $region19: #{bert_pooler.1} parent=1 // pred_check_branch
      %102 = sbr.rel (0) target = $region21
    $region20: #{bert_pooler.1} parent=1 // pred_region
      %s104 = ssub.s32 32, 32
      %105 = vsyncadd [#allocation4], %s104
      %s107 = sshll.u32 [#allocation5], 4
      %s108 = int_to_ptr.vmem [resolvable:$true] %s107
      %110 = dma.vmem_to_hbm [thread:$0]  %s108, 32, %s3, [#allocation4]
    $region21: #{bert_pooler.1} parent=1 // pred_fallthru
      _
    // Predicated region
    $region22: #{bert_pooler.1} parent=1 // pred_check
      _
    $region23: #{bert_pooler.1} parent=1 // pred_check_branch
      %112 = sbr.rel (0) target = $region25
    $region24: #{bert_pooler.1} parent=1 // pred_region
      %113 = dma.done [#allocation4], 32
    $region25: #{bert_pooler.1} parent=1 // pred_fallthru
      _
    %114 = vsyncpa [#allocation3], 1
    %115 = vsyncpa [#allocation4], 1

</llo_original>
